<compile_context>
chip_gen: v7x
topology: tpu7x:2x2x1
jax: 0.10.0
libtpu: 0.0.40
codegen_flags: <defaults>
</compile_context>

<pallas_src>
import functools

import jax
import jax.numpy as jnp
from jax.experimental import pallas as pl
from jax.experimental.pallas import tpu as pltpu


def se_kernel(x_ref, p_ref, o_ref, *, mid):
    # x_ref block: (NB, C, HW) -- channels on sublanes, spatial on lanes.
    # p_ref block: (C, 128) parameter slab:
    #   [:, 0:mid]            = w1^T            (C, mid)
    #   [:, mid:2*mid]        = w2 (BN folded)  (C, mid)
    #   [:, 2*mid]            = b2 (BN folded)  (C,)
    #   [0, 2*mid+1:3*mid+1]  = b1              (mid,)
    w1t = p_ref[:, 0:mid]                                     # (C, mid)
    w2 = p_ref[:, mid:2 * mid]                                # (C, mid)
    b2 = p_ref[:, 2 * mid:2 * mid + 1]                        # (C, 1)
    b1 = p_ref[0:1, 2 * mid + 1:3 * mid + 1]                  # (1, mid)

    # --- squeeze: global average pool over spatial positions (lane reduce) --
    x32 = x_ref[...].astype(jnp.float32)                      # (NB, C, HW)
    pooled = jnp.mean(x32, axis=2, keepdims=True)             # (NB, C, 1)

    # --- excite (VPU/XLU path, no MXU) --------------------------------------
    # conv1 1x1: h[n, j] = sum_c w1[j, c] * pooled[n, c] + b1[j]
    h = jnp.sum(w1t[None, :, :] * pooled, axis=1, keepdims=True) + b1  # (NB,1,mid)
    h = jnp.maximum(h, 0.0)                                   # ReLU
    # BatchNorm (eval) is folded into w2/b2.
    # conv2 1x1: s[n, c] = sum_j w2'[c, j] * h[n, j] + b2'[c]
    s = jnp.sum(w2[None, :, :] * h, axis=2, keepdims=True) + b2        # (NB,C,1)
    s = jax.nn.sigmoid(s)

    # --- scale: broadcast multiply over spatial positions (lane broadcast) --
    # Re-read x from VMEM (don't keep the whole block live across the excite).
    o_ref[...] = (x_ref[...].astype(jnp.float32) * s).astype(o_ref.dtype)


def _choose_block_batch(n, per_sample_bytes, target_bytes=2 << 20, min_steps=2):
    """Largest NB dividing n with NB*per_sample <= target, keeping >= min_steps
    grid steps (when n allows) so the batch axis can split across v7x's 2 TCs."""
    best = 1
    for nb in range(1, n + 1):
        if n % nb:
            continue
        if nb > 1 and nb * per_sample_bytes > target_bytes:
            break
        if n >= min_steps and (n // nb) < min_steps:
            break
        best = nb
    return best


def se_module(x_nchw, params):
    """x_nchw: (N, C, H, W) float32.  Returns (N, C, H, W)."""
    N, C, H, W = x_nchw.shape
    HW = H * W
    mid = params["mid"]
    slab = params["slab"]                      # (C, 128) packed parameters

    # NCHW -> (N, C, HW): a pure reshape (no data movement, no transpose).
    x_r = x_nchw.reshape(N, C, HW)

    itemsize = jnp.dtype(x_nchw.dtype).itemsize
    nb = _choose_block_batch(N, C * HW * itemsize)
    steps = N // nb

    cost = pl.CostEstimate(
        flops=N * (2 * C * HW + 4 * C * mid),              # pool + scale + tiny convs
        transcendentals=N * C,                             # sigmoid per channel
        bytes_accessed=(2 * N * C * HW * itemsize          # read x + write out
                        + steps * slab.size * slab.dtype.itemsize),
    )

    kernel = functools.partial(se_kernel, mid=mid)

    out_r = pl.pallas_call(
        kernel,
        out_shape=jax.ShapeDtypeStruct((N, C, HW), x_nchw.dtype),
        grid=(steps,),
        in_specs=[
            pl.BlockSpec((nb, C, HW), lambda i: (i, 0, 0)),   # x slab (NB samples)
            pl.BlockSpec(slab.shape, lambda i: (0, 0)),       # packed params (resident)
        ],
        out_specs=pl.BlockSpec((nb, C, HW), lambda i: (i, 0, 0)),
        compiler_params=pltpu.CompilerParams(
            dimension_semantics=("parallel",),                # shard over 2 TCs on v7x
            vmem_limit_bytes=32 << 20,                        # safe on v5e/v6e/v7x
        ),
        cost_estimate=cost,
    )(x_r, slab)

    # (N, C, HW) -> NCHW (pure reshape).
    return out_r.reshape(N, C, H, W)


def init_params(key, channels, ratio=12, slab_cols=128):
    mid = channels // ratio
    k1, k2, k3, k4 = jax.random.split(key, 4)
    # Conv2d(channels, mid, 1): weight (mid, channels, 1, 1), bias (mid,)
    w1 = jax.random.normal(k1, (mid, channels), jnp.float32) * 0.1
    b1 = jax.random.normal(k2, (mid,), jnp.float32) * 0.1
    # Conv2d(mid, channels, 1): weight (channels, mid, 1, 1), bias (channels,)
    w2 = jax.random.normal(k3, (channels, mid), jnp.float32) * 0.1
    b2 = jax.random.normal(k4, (channels,), jnp.float32) * 0.1
    # BatchNorm2d(mid), eval mode with default stats/affine.
    gamma = jnp.ones((mid,), jnp.float32)
    beta = jnp.zeros((mid,), jnp.float32)
    running_mean = jnp.zeros((mid,), jnp.float32)
    running_var = jnp.ones((mid,), jnp.float32)
    eps = 1e-5
    bn_scale = gamma / jnp.sqrt(running_var + eps)
    bn_shift = beta - running_mean * bn_scale

    # Fold eval-mode BN (affine, applied after ReLU) into conv2:
    #   conv2(bn(y)) = (w2 * scale) @ y + (w2 @ shift + b2)
    w2_f = w2 * bn_scale[None, :]                  # (channels, mid)
    b2_f = b2 + w2 @ bn_shift                      # (channels,)

    # Pack everything the kernel needs into a single (C, slab_cols) f32 slab.
    assert 3 * mid + 1 <= slab_cols
    slab = jnp.zeros((channels, slab_cols), jnp.float32)
    slab = slab.at[:, 0:mid].set(w1.T)
    slab = slab.at[:, mid:2 * mid].set(w2_f)
    slab = slab.at[:, 2 * mid].set(b2_f)
    slab = slab.at[0, 2 * mid + 1:3 * mid + 1].set(b1)

    return {
        "slab": slab,
        "mid": mid,
        # Raw (unfolded) params for the pure-JAX reference check.
        "w1": w1, "b1": b1, "w2": w2, "b2": b2,
        "bn_scale": bn_scale, "bn_shift": bn_shift,
    }


def se_reference(x, p):
    """Pure-JAX reference with PyTorch eval-mode semantics (unfolded BN)."""
    pooled = x.mean((2, 3))                                       # (N, C)
    h = pooled @ p["w1"].T + p["b1"]                              # (N, mid)
    h = jnp.maximum(h, 0.0)
    h = h * p["bn_scale"] + p["bn_shift"]
    s = jax.nn.sigmoid(h @ p["w2"].T + p["b2"][None, :])          # (N, C)
    return x * s[:, :, None, None]


if __name__ == "__main__":
    key = jax.random.PRNGKey(0)
    kx, kp = jax.random.split(key)

    N, C, H, W = 2, 48, 16, 16      # ratio=12 -> mid=4, HW=256 (lane-dense)
    x = jax.random.normal(kx, (N, C, H, W), jnp.float32)
    params = init_params(kp, C, ratio=12)

    out = se_module(x, params)
    out = jax.block_until_ready(out)

    ref = se_reference(x, params)
    assert out.shape == (N, C, H, W)
    assert jnp.allclose(out, ref, atol=1e-5, rtol=1e-5), "mismatch vs reference"

    print("KERNEL_OK")
</pallas_src>

<mosaic_0001>
module attributes {stable_mosaic.version = 11 : i64} {
  func.func @se_kernel(%arg0: i32, %arg1: memref<1x48x256xf32, #tpu.memory_space<vmem>>, %arg2: memref<48x128xf32, #tpu.memory_space<vmem>>, %arg3: memref<1x48x256xf32, #tpu.memory_space<vmem>>) attributes {dimension_semantics = [#tpu.dimension_semantics<parallel>], iteration_bounds = array<i64: 2>, scalar_prefetch = 0 : i64, scratch_operands = 0 : i64, tpu.core_type = #tpu.core_type<tc>, window_params = [{transform_indices = @transform_0, window_bounds = array<i64: 1, 48, 256>}, {pipeline_mode = #tpu.pipeline_mode<synchronous>, transform_indices = @transform_1, window_bounds = array<i64: 48, 128>}, {transform_indices = @transform_2, window_bounds = array<i64: 1, 48, 256>}]} {
    %c0 = arith.constant 0 : index
    %c0_0 = arith.constant 0 : index
    %0 = vector.load %arg2[%c0, %c0_0] : memref<48x128xf32, #tpu.memory_space<vmem>>, vector<48x4xf32>
    %c0_1 = arith.constant 0 : index
    %c4 = arith.constant 4 : index
    %1 = vector.load %arg2[%c0_1, %c4] : memref<48x128xf32, #tpu.memory_space<vmem>>, vector<48x4xf32>
    %c0_2 = arith.constant 0 : index
    %c8 = arith.constant 8 : index
    %2 = vector.load %arg2[%c0_2, %c8] : memref<48x128xf32, #tpu.memory_space<vmem>>, vector<48x1xf32>
    %c0_3 = arith.constant 0 : index
    %c9 = arith.constant 9 : index
    %3 = vector.load %arg2[%c0_3, %c9] : memref<48x128xf32, #tpu.memory_space<vmem>>, vector<1x4xf32>
    %c0_4 = arith.constant 0 : index
    %c0_5 = arith.constant 0 : index
    %c0_6 = arith.constant 0 : index
    %4 = vector.load %arg1[%c0_4, %c0_5, %c0_6] : memref<1x48x256xf32, #tpu.memory_space<vmem>>, vector<1x48x256xf32>
    %cst = arith.constant dense<0.000000e+00> : vector<1x48xf32>
    %5 = vector.multi_reduction <add>, %4, %cst [2] : vector<1x48x256xf32> to vector<1x48xf32>
    %6 = vector.shape_cast %5 : vector<1x48xf32> to vector<1x48x1xf32>
    %cst_7 = arith.constant 2.560000e+02 : f32
    %7 = vector.broadcast %cst_7 : f32 to vector<1x48x1xf32>
    %8 = arith.divf %6, %7 : vector<1x48x1xf32>
    %9 = vector.shape_cast %0 : vector<48x4xf32> to vector<1x48x4xf32>
    %10 = vector.broadcast %8 : vector<1x48x1xf32> to vector<1x48x4xf32>
    %11 = arith.mulf %9, %10 : vector<1x48x4xf32>
    %cst_8 = arith.constant dense<0.000000e+00> : vector<1x4xf32>
    %12 = vector.multi_reduction <add>, %11, %cst_8 [1] : vector<1x48x4xf32> to vector<1x4xf32>
    %13 = vector.shape_cast %12 : vector<1x4xf32> to vector<1x1x4xf32>
    %14 = vector.shape_cast %3 : vector<1x4xf32> to vector<1x1x4xf32>
    %15 = arith.addf %13, %14 : vector<1x1x4xf32>
    %cst_9 = arith.constant 0.000000e+00 : f32
    %16 = vector.broadcast %cst_9 : f32 to vector<1x1x4xf32>
    %17 = arith.maximumf %15, %16 : vector<1x1x4xf32>
    %18 = vector.shape_cast %1 : vector<48x4xf32> to vector<1x48x4xf32>
    %19 = vector.broadcast %17 : vector<1x1x4xf32> to vector<1x48x4xf32>
    %20 = arith.mulf %18, %19 : vector<1x48x4xf32>
    %cst_10 = arith.constant dense<0.000000e+00> : vector<1x48xf32>
    %21 = vector.multi_reduction <add>, %20, %cst_10 [2] : vector<1x48x4xf32> to vector<1x48xf32>
    %22 = vector.shape_cast %21 : vector<1x48xf32> to vector<1x48x1xf32>
    %23 = vector.shape_cast %2 : vector<48x1xf32> to vector<1x48x1xf32>
    %24 = arith.addf %22, %23 : vector<1x48x1xf32>
    %25 = arith.negf %24 : vector<1x48x1xf32>
    %26 = math.exp %25 : vector<1x48x1xf32>
    %cst_11 = arith.constant 1.000000e+00 : f32
    %27 = vector.broadcast %cst_11 : f32 to vector<1x48x1xf32>
    %28 = arith.addf %27, %26 : vector<1x48x1xf32>
    %29 = arith.divf %27, %28 : vector<1x48x1xf32>
    %c0_12 = arith.constant 0 : index
    %c0_13 = arith.constant 0 : index
    %c0_14 = arith.constant 0 : index
    %30 = vector.load %arg1[%c0_12, %c0_13, %c0_14] : memref<1x48x256xf32, #tpu.memory_space<vmem>>, vector<1x48x256xf32>
    %31 = vector.broadcast %29 : vector<1x48x1xf32> to vector<1x48x256xf32>
    %32 = arith.mulf %30, %31 : vector<1x48x256xf32>
    %c0_15 = arith.constant 0 : index
    %c0_16 = arith.constant 0 : index
    %c0_17 = arith.constant 0 : index
    %33 = vector.load %arg3[%c0_15, %c0_16, %c0_17] : memref<1x48x256xf32, #tpu.memory_space<vmem>>, vector<1x48x256xf32>
    tpu.vector_store %arg3[%c0_15, %c0_16, %c0_17], %32 {strides = array<i32>} : memref<1x48x256xf32, #tpu.memory_space<vmem>>, vector<1x48x256xf32>,
    return
  }
  func.func @transform_0(%arg0: i32) -> (i32, i32, i32) {
    %c0_i32 = arith.constant 0 : i32
    %c0_i32_0 = arith.constant 0 : i32
    %c0_i32_1 = arith.constant 0 : i32
    return %arg0, %c0_i32, %c0_i32_0 : i32, i32, i32
  }
  func.func @transform_1(%arg0: i32) -> (i32, i32) {
    %c0_i32 = arith.constant 0 : i32
    %c0_i32_0 = arith.constant 0 : i32
    %c0_i32_1 = arith.constant 0 : i32
    return %c0_i32, %c0_i32_0 : i32, i32
  }
  func.func @transform_2(%arg0: i32) -> (i32, i32, i32) {
    %c0_i32 = arith.constant 0 : i32
    %c0_i32_0 = arith.constant 0 : i32
    %c0_i32_1 = arith.constant 0 : i32
    return %arg0, %c0_i32, %c0_i32_0 : i32, i32, i32
  }
}

</mosaic_0001>

<llo_original>
// kernel: tpu_custom_call.1
$region0: #{tpu_custom_call.1}
  #allocation0 [shape = 'u32[]', space=smem, size = 0x4, offset = 0x4, fixed_abs, tag = 'smem constant byte address 0x4 - core index']
  #allocation1 [shape = 'u32[144,128]{1,0:T(1,128)}', space=vmem, size = 0x12000, scoped, tag = 'internal scratch']
  %s0 = inlined_call_operand.hbm [shape: f32[2,48,256], index: 0, kind: input, shape index: {}]
  %s1 = inlined_call_operand.hbm [shape: f32[48,128], index: 1, kind: input, shape index: {}]
  %s2 = inlined_call_operand.hbm [shape: f32[2,48,256], index: 2, kind: output, shape index: {}]
  %s3 = sld [smem:[#allocation0]]
  $region49: #{tpu_custom_call.1} parent=0
    _
  %s5 = ssub.s32 1, %s3
  %s6 = scalar_select 0, %s5, %s3
  $region1: #{tpu_custom_call.1} parent=0
    #allocation2 [shape = 'u8[98304]{0}', space=vmem, size = 0x18000, scoped, tag = 'input window, operand 0']
    #allocation3 [shape = 's32[2]{0}', space=sflag, size = 0x8, scoped, tag = 'scoped memory for tpu_custom_call.1']
    #allocation4 [shape = 's32[2]{0}', space=sflag, size = 0x8, scoped, tag = 'scoped memory for tpu_custom_call.1']
    #allocation5 [shape = 'u8[24576]{0}', space=vmem, size = 0x6000, scoped, tag = 'input window, operand 1, single buffered']
    #allocation6 [shape = 's32[1]{0}', space=sflag, size = 0x4, scoped, tag = 'scoped memory for tpu_custom_call.1']
    #allocation7 [shape = 'u8[98304]{0}', space=vmem, size = 0x18000, scoped, tag = 'output window, operand 0']
    %7 = vsyncpa [#allocation3], 0
    %s8 = scalar_lea.sflag [#allocation3], 1
    %9 = vsyncpa %s8, 0
    %10 = vsyncpa [#allocation6], 0
    %11 = vsyncpa [#allocation4], 0
    %s12 = scalar_lea.sflag [#allocation4], 1
    %13 = vsyncpa %s12, 0
    loop: start=0, step=1, limit=4
    $region2: #{tpu_custom_call.1} parent=1 // loop_pre_header
      _
    $region3: #{tpu_custom_call.1} parent=1 // loop_header
      %s15 = sphi 0, %s19
      %p16 = scmp.ge.s32.totalorder %s15, 4
      %s25 = sphi 0, %s27
      %s28 = sphi 0, %s25
      %s29 = sphi 0, %s28
      %s45 = sphi 0, %s29
      %s49 = sphi 0, %s49
      %s51 = sphi 0, %s49
      %s52 = sphi 0, %s51
      %s66 = sphi 0, %s52
      %s72 = sphi 0, %s74
      %s75 = sphi 0, %s72
      %s76 = sphi 0, %s75
      %s92 = sphi 0, %s76
    $region4: #{tpu_custom_call.1} parent=1 // loop_header_branch
      %18 = sbr.rel (%p16) target = $region8
    $region5: #{tpu_custom_call.1} parent=1 // loop_body
      %s20 = ssub.s32 %s15, 1
      %s21 = ssub.s32 %s15, 2
      %s22 = sadd.s32 %s15, 1
      %s23 = ssub.s32 %s15, %s22
      %p24 = scmp.eq.s32.totalorder %s23, 0
      %s26 = sadd.s32 %s25, 1
      %s27 = scalar_select %p24, %s25, %s26
      %p30 = pneg %p24
      %p31 = scmp.eq.s32.totalorder %s15, 1
      %p32 = por %p30, %p31
      %p33 = scmp.ne.s32.totalorder %s25, %s28
      %p34 = scmp.eq.s32.totalorder %s15, 0
      %p35 = por %p33, %p34
      %p36 = scmp.ne.s32.totalorder %s25, %s28
      %p37 = scmp.eq.s32.totalorder %s20, 1
      %p38 = por %p36, %p37
      %p39 = scmp.ne.s32.totalorder %s28, %s29
      %p40 = scmp.eq.s32.totalorder %s20, 0
      %p41 = por %p39, %p40
      %p42 = scmp.ne.s32.totalorder %s28, %s29
      %p43 = scmp.eq.s32.totalorder %s21, 1
      %p44 = por %p42, %p43
      %p46 = scmp.ne.s32.totalorder %s29, %s45
      %p47 = scmp.eq.s32.totalorder %s21, 0
      %p48 = por %p46, %p47
      %s50 = sadd.s32 %s49, 1
      %p53 = scmp.eq.s32.totalorder %s15, 1
      %p54 = scmp.ne.s32.totalorder %s49, %s51
      %p55 = scmp.eq.s32.totalorder %s15, 0
      %p56 = por %p54, %p55
      %p57 = scmp.ne.s32.totalorder %s49, %s51
      %p58 = scmp.eq.s32.totalorder %s20, 1
      %p59 = por %p57, %p58
      %p60 = scmp.ne.s32.totalorder %s51, %s52
      %p61 = scmp.eq.s32.totalorder %s20, 0
      %p62 = por %p60, %p61
      %p63 = scmp.ne.s32.totalorder %s51, %s52
      %p64 = scmp.eq.s32.totalorder %s21, 1
      %p65 = por %p63, %p64
      %p67 = scmp.ne.s32.totalorder %s52, %s66
      %p68 = scmp.eq.s32.totalorder %s21, 0
      %p69 = por %p67, %p68
      %s70 = ssub.s32 %s15, %s22
      %p71 = scmp.eq.s32.totalorder %s70, 0
      %s73 = sadd.s32 %s72, 1
      %s74 = scalar_select %p71, %s72, %s73
      %p77 = pneg %p71
      %p78 = scmp.eq.s32.totalorder %s15, 1
      %p79 = por %p77, %p78
      %p80 = scmp.ne.s32.totalorder %s72, %s75
      %p81 = scmp.eq.s32.totalorder %s15, 0
      %p82 = por %p80, %p81
      %p83 = scmp.ne.s32.totalorder %s72, %s75
      %p84 = scmp.eq.s32.totalorder %s20, 1
      %p85 = por %p83, %p84
      %p86 = scmp.ne.s32.totalorder %s75, %s76
      %p87 = scmp.eq.s32.totalorder %s20, 0
      %p88 = por %p86, %p87
      %p89 = scmp.ne.s32.totalorder %s75, %s76
      %p90 = scmp.eq.s32.totalorder %s21, 1
      %p91 = por %p89, %p90
      %p93 = scmp.ne.s32.totalorder %s76, %s92
      %p94 = scmp.eq.s32.totalorder %s21, 0
      %p95 = por %p93, %p94
      %p96 = scmp.le.s32.totalorder 1, %s15
      %p97 = scmp.lt.s32.totalorder %s15, 3
      %p98 = pnand %p96, %p97
      %p99 = pneg %p98
      // Predicated region
      $region9: #{tpu_custom_call.1} parent=5 // pred_check
        _
      $region10: #{tpu_custom_call.1} parent=5 // pred_check_branch
        %101 = sbr.rel (%p98) target = $region12
      $region11: #{tpu_custom_call.1} parent=5 // pred_region
        %s102 = ssub.s32 %s15, 1
        // Predicated region
        $region13: #{tpu_custom_call.1} parent=11 // pred_check
          %p103 = pneg %p62
        $region14: #{tpu_custom_call.1} parent=11 // pred_check_branch
          %105 = sbr.rel (%p103) target = $region16
        $region15: #{tpu_custom_call.1} parent=11 // pred_region
          %s107 = ssub.s32 768, 768
          %108 = vsyncadd [#allocation6], %s107
          %s109 = sshll.u32 [#allocation5], 4
          %s110 = int_to_ptr.vmem [resolvable:$true] %s109
          %115 = dma.hbm_to_vmem [thread:$0]  %s1, 768, %s110, [#allocation6], 128, 128, 8
        $region16: #{tpu_custom_call.1} parent=11 // pred_fallthru
          _
      $region12: #{tpu_custom_call.1} parent=5 // pred_fallthru
        _
      %p116 = scmp.lt.s32.totalorder %s15, 2
      // Predicated region
      $region17: #{tpu_custom_call.1} parent=5 // pred_check
        %p117 = pneg %p116
      $region18: #{tpu_custom_call.1} parent=5 // pred_check_branch
        %119 = sbr.rel (%p117) target = $region20
      $region19: #{tpu_custom_call.1} parent=5 // pred_region
        // Predicated region
        $region21: #{tpu_custom_call.1} parent=19 // pred_check
          %p120 = pneg %p35
        $region22: #{tpu_custom_call.1} parent=19 // pred_check_branch
          %122 = sbr.rel (%p120) target = $region24
        $region23: #{tpu_custom_call.1} parent=19 // pred_region
          %s123 = sand.u32 %s25, 1
          %s124 = scalar_lea.sflag [#allocation3], %s123
          %s125 = sand.u32 %s25, 1
          %s126 = smul.addr %s125, 96
          %s127 = scalar_lea.vmem [#allocation2], %s126
          %s129 = ssub.s32 1536, 1536
          %130 = vsyncadd %s124, %s129
          %s131 = smul.addr %s15, 12
          %s132 = smul.addr %s131, 128
          %s133 = scalar_lea.hbm %s0, %s132
          %s134 = sshll.u32 %s127, 4
          %s135 = int_to_ptr.vmem [resolvable:$true] %s134
          %140 = dma.hbm_to_vmem [thread:$0]  %s133, 1536, %s135, %s124, 256, 256, 16
        $region24: #{tpu_custom_call.1} parent=19 // pred_fallthru
          _
      $region20: #{tpu_custom_call.1} parent=5 // pred_fallthru
        _
      %p141 = scmp.le.s32.totalorder 1, %s15
      %p142 = scmp.lt.s32.totalorder %s15, 3
      %p143 = pnand %p141, %p142
      %p144 = pneg %p143
      // Predicated region
      $region25: #{tpu_custom_call.1} parent=5 // pred_check
        _
      $region26: #{tpu_custom_call.1} parent=5 // pred_check_branch
        %146 = sbr.rel (%p143) target = $region28
      $region27: #{tpu_custom_call.1} parent=5 // pred_region
        %s147 = ssub.s32 %s15, 1
        %s148 = sand.u32 %s28, 1
        %s149 = scalar_lea.sflag [#allocation3], %s148
        %s150 = sand.u32 %s28, 1
        %s151 = smul.addr %s150, 96
        %s152 = scalar_lea.vmem [#allocation2], %s151
        // Predicated region
        $region29: #{tpu_custom_call.1} parent=27 // pred_check
          %p153 = pneg %p41
        $region30: #{tpu_custom_call.1} parent=27 // pred_check_branch
          %155 = sbr.rel (%p153) target = $region32
        $region31: #{tpu_custom_call.1} parent=27 // pred_region
          %156 = dma.done %s149, 1536
        $region32: #{tpu_custom_call.1} parent=27 // pred_fallthru
          _
        // Predicated region
        $region33: #{tpu_custom_call.1} parent=27 // pred_check
          %p157 = pneg %p62
        $region34: #{tpu_custom_call.1} parent=27 // pred_check_branch
          %159 = sbr.rel (%p157) target = $region36
        $region35: #{tpu_custom_call.1} parent=27 // pred_region
          %160 = dma.done [#allocation6], 768
        $region36: #{tpu_custom_call.1} parent=27 // pred_fallthru
          _
        %s161 = sand.u32 %s28, 1
        %s162 = scalar_lea.sflag [#allocation3], %s161
        %s163 = sand.u32 %s28, 1
        %s164 = smul.addr %s163, 96
        %s165 = scalar_lea.vmem [#allocation2], %s164
        %p166 = pneg %p41
        %p167 = pneg %p38
        %p168 = pneg %p62
        %p169 = pneg %p59
        %p170 = pneg %p88
        %p171 = pneg %p85
        %s172 = sand.u32 %s75, 1
        %s173 = scalar_lea.sflag [#allocation4], %s172
        %s174 = sand.u32 %s75, 1
        %s175 = smul.addr %s174, 96
        %s176 = scalar_lea.vmem [#allocation7], %s175
        %v177 = vld [vmem:[#allocation5] sm:$0xff]
        %v178 = vld [vmem:[#allocation5 + $0x8] sm:$0xff]
        %v179 = vld [vmem:[#allocation5 + $0x10] sm:$0xff]
        %v180 = vld [vmem:[#allocation5 + $0x18] sm:$0xff]
        %v181 = vld [vmem:[#allocation5 + $0x20] sm:$0xff]
        %v182 = vld [vmem:[#allocation5 + $0x28] sm:$0xff]
        %v183 = vld [vmem:[#allocation5] sm:$0x1]
        %v184 = vld [vmem:[%s152] sm:$0xff]
        %v185 = vld [vmem:[%s152 + $0x8] sm:$0xff]
        %v186 = vld [vmem:[%s152 + $0x10] sm:$0xff]
        %v187 = vld [vmem:[%s152 + $0x18] sm:$0xff]
        %v188 = vld [vmem:[%s152 + $0x20] sm:$0xff]
        %v189 = vld [vmem:[%s152 + $0x28] sm:$0xff]
        %v190 = vld [vmem:[%s152 + $0x30] sm:$0xff]
        %v191 = vld [vmem:[%s152 + $0x38] sm:$0xff]
        %v192 = vld [vmem:[%s152 + $0x40] sm:$0xff]
        %v193 = vld [vmem:[%s152 + $0x48] sm:$0xff]
        %v194 = vld [vmem:[%s152 + $0x50] sm:$0xff]
        %v195 = vld [vmem:[%s152 + $0x58] sm:$0xff]
        %v196 = vadd.f32 %v184, %v185
        %197 = vadd.xlane.f32.xlu0 %v196
        %v198 = vpop.xlane.xlu0 %197
        %v199 = vadd.f32 %v186, %v187
        %200 = vadd.xlane.f32.xlu0 %v199
        %v201 = vpop.xlane.xlu0 %200
        %v202 = vadd.f32 %v188, %v189
        %203 = vadd.xlane.f32.xlu0 %v202
        %v204 = vpop.xlane.xlu0 %203
        %v205 = vadd.f32 %v190, %v191
        %206 = vadd.xlane.f32.xlu0 %v205
        %v207 = vpop.xlane.xlu0 %206
        %v208 = vadd.f32 %v192, %v193
        %209 = vadd.xlane.f32.xlu0 %v208
        %v210 = vpop.xlane.xlu0 %209
        %v211 = vadd.f32 %v194, %v195
        %212 = vadd.xlane.f32.xlu0 %v211
        %v213 = vpop.xlane.xlu0 %212
        %v214 = vrcp.pop 256.0
        %v215 = vmul.f32 %v198, %v214
        %v216 = vmul.f32 %v201, %v214
        %v217 = vmul.f32 %v204, %v214
        %v218 = vmul.f32 %v207, %v214
        %v219 = vmul.f32 %v210, %v214
        %v220 = vmul.f32 %v213, %v214
        %v221 = vmul.f32 %v177, %v215
        %v222 = vmul.f32 %v178, %v216
        %v223 = vmul.f32 %v179, %v217
        %v224 = vmul.f32 %v180, %v218
        %v225 = vmul.f32 %v181, %v219
        %v226 = vmul.f32 %v182, %v220
        %vm227 = vcmask 31744
        %v228 = vsel %vm227, %v221, 0.0
        %v229 = vsel %vm227, %v222, 0.0
        %v230 = vadd.f32 %v228, %v229
        %v231 = vsel %vm227, %v223, 0.0
        %v232 = vadd.f32 %v230, %v231
        %v233 = vsel %vm227, %v224, 0.0
        %v234 = vadd.f32 %v232, %v233
        %v235 = vsel %vm227, %v225, 0.0
        %v236 = vadd.f32 %v234, %v235
        %v237 = vsel %vm227, %v226, 0.0
        %v238 = vadd.f32 %v236, %v237
        %v239 = vrot.slane %v238, 4
        %v240 = vadd.f32 %v238, %v239
        %v241 = vrot.slane %v240, 2
        %v242 = vadd.f32 %v240, %v241
        %v243 = vrot.slane %v242, 1
        %v244 = vadd.f32 %v242, %v243
        %246 = vrot.lane.b32.xlu0 %v183, 119
        %v247 = vpop.permute.xlu0 %246
        %v249 = vadd.f32 %v244, %v247
        %v250 = vmax.f32 %v249, 0.0
        %v251 = vlaneseq
        %v252 = vshrl.u32 %v251, 7
        %v253 = vsub.s32 0, %v252
        %v254 = vrot.slane %v250, %v253
        %256 = vrot.lane.b32.xlu0 %v254, 4
        %v257 = vpop.permute.xlu0 %256
        %v259 = vmul.f32 %v177, %v257
        %v260 = vmul.f32 %v178, %v257
        %v261 = vmul.f32 %v179, %v257
        %v262 = vmul.f32 %v180, %v257
        %v263 = vmul.f32 %v181, %v257
        %v264 = vmul.f32 %v182, %v257
        %271 = vrot.lane.b32.xlu0 %v259, 124
        %v272 = vpop.permute.xlu0 %271
        %273 = vrot.lane.b32.xlu0 %v260, 124
        %v274 = vpop.permute.xlu0 %273
        %275 = vrot.lane.b32.xlu0 %v261, 124
        %v276 = vpop.permute.xlu0 %275
        %277 = vrot.lane.b32.xlu0 %v262, 124
        %v278 = vpop.permute.xlu0 %277
        %279 = vrot.lane.b32.xlu0 %v263, 124
        %v280 = vpop.permute.xlu0 %279
        %281 = vrot.lane.b32.xlu0 %v264, 124
        %v282 = vpop.permute.xlu0 %281
        %v289 = vsel %vm227, %v272, 0.0
        %290 = vadd.xlane.f32.xlu0 %v289
        %v291 = vpop.xlane.xlu0 %290
        %v292 = vsel %vm227, %v274, 0.0
        %293 = vadd.xlane.f32.xlu0 %v292
        %v294 = vpop.xlane.xlu0 %293
        %v295 = vsel %vm227, %v276, 0.0
        %296 = vadd.xlane.f32.xlu0 %v295
        %v297 = vpop.xlane.xlu0 %296
        %v298 = vsel %vm227, %v278, 0.0
        %299 = vadd.xlane.f32.xlu0 %v298
        %v300 = vpop.xlane.xlu0 %299
        %v301 = vsel %vm227, %v280, 0.0
        %302 = vadd.xlane.f32.xlu0 %v301
        %v303 = vpop.xlane.xlu0 %302
        %v304 = vsel %vm227, %v282, 0.0
        %305 = vadd.xlane.f32.xlu0 %v304
        %v306 = vpop.xlane.xlu0 %305
        %v307 = vadd.f32 %v291, %v177
        %v308 = vadd.f32 %v294, %v178
        %v309 = vadd.f32 %v297, %v179
        %v310 = vadd.f32 %v300, %v180
        %v311 = vadd.f32 %v303, %v181
        %v312 = vadd.f32 %v306, %v182
        %v313 = vxor.u32 %v307, 2147483648
        %v314 = vxor.u32 %v308, 2147483648
        %v315 = vxor.u32 %v309, 2147483648
        %v316 = vxor.u32 %v310, 2147483648
        %v317 = vxor.u32 %v311, 2147483648
        %v318 = vxor.u32 %v312, 2147483648
        %v319 = vmul.f32 %v313, 1.442695
        %v320 = vpow.pop %v319
        %v321 = vmul.f32 %v314, 1.442695
        %v322 = vpow.pop %v321
        %v323 = vmul.f32 %v315, 1.442695
        %v324 = vpow.pop %v323
        %v325 = vmul.f32 %v316, 1.442695
        %v326 = vpow.pop %v325
        %v327 = vmul.f32 %v317, 1.442695
        %v328 = vpow.pop %v327
        %v329 = vmul.f32 %v318, 1.442695
        %v330 = vpow.pop %v329
        %v331 = vadd.f32 %v320, 1.0
        %v332 = vadd.f32 %v322, 1.0
        %v333 = vadd.f32 %v324, 1.0
        %v334 = vadd.f32 %v326, 1.0
        %v335 = vadd.f32 %v328, 1.0
        %v336 = vadd.f32 %v330, 1.0
        %v337 = vrcp.pop %v331
        %v338 = vmul.f32 1.0, %v337
        %v339 = vrcp.pop %v332
        %v340 = vmul.f32 1.0, %v339
        %v341 = vrcp.pop %v333
        %v342 = vmul.f32 1.0, %v341
        %v343 = vrcp.pop %v334
        %v344 = vmul.f32 1.0, %v343
        %v345 = vrcp.pop %v335
        %v346 = vmul.f32 1.0, %v345
        %v347 = vrcp.pop %v336
        %v348 = vmul.f32 1.0, %v347
        %350 = vset.pattern.permute.xlu0 8
        %351 = vperm.xlu0 %350, %v338
        %v352 = vpop.permute.xlu0 %351
        %355 = vset.pattern.permute.xlu0 8
        %356 = vperm.xlu0 %355, %v340
        %v357 = vpop.permute.xlu0 %356
        %360 = vset.pattern.permute.xlu0 8
        %361 = vperm.xlu0 %360, %v342
        %v362 = vpop.permute.xlu0 %361
        %365 = vset.pattern.permute.xlu0 8
        %366 = vperm.xlu0 %365, %v344
        %v367 = vpop.permute.xlu0 %366
        %370 = vset.pattern.permute.xlu0 8
        %371 = vperm.xlu0 %370, %v346
        %v372 = vpop.permute.xlu0 %371
        %375 = vset.pattern.permute.xlu0 8
        %376 = vperm.xlu0 %375, %v348
        %v377 = vpop.permute.xlu0 %376
        %v379 = vmul.f32 %v184, %v352
        %v380 = vmul.f32 %v185, %v352
        %v381 = vmul.f32 %v186, %v357
        %v382 = vmul.f32 %v187, %v357
        %v383 = vmul.f32 %v188, %v362
        %v384 = vmul.f32 %v189, %v362
        %v385 = vmul.f32 %v190, %v367
        %v386 = vmul.f32 %v191, %v367
        %v387 = vmul.f32 %v192, %v372
        %v388 = vmul.f32 %v193, %v372
        %v389 = vmul.f32 %v194, %v377
        %v390 = vmul.f32 %v195, %v377
        %391 = vst [vmem:[%s176] sm:$0xff] %v379
        %392 = vst [vmem:[%s176 + $0x8] sm:$0xff] %v380
        %393 = vst [vmem:[%s176 + $0x10] sm:$0xff] %v381
        %394 = vst [vmem:[%s176 + $0x18] sm:$0xff] %v382
        %395 = vst [vmem:[%s176 + $0x20] sm:$0xff] %v383
        %396 = vst [vmem:[%s176 + $0x28] sm:$0xff] %v384
        %397 = vst [vmem:[%s176 + $0x30] sm:$0xff] %v385
        %398 = vst [vmem:[%s176 + $0x38] sm:$0xff] %v386
        %399 = vst [vmem:[%s176 + $0x40] sm:$0xff] %v387
        %400 = vst [vmem:[%s176 + $0x48] sm:$0xff] %v388
        %401 = vst [vmem:[%s176 + $0x50] sm:$0xff] %v389
        %402 = vst [vmem:[%s176 + $0x58] sm:$0xff] %v390
        %s403 = sand.u32 %s75, 1
        %s404 = scalar_lea.sflag [#allocation4], %s403
        %s405 = sand.u32 %s75, 1
        %s406 = smul.addr %s405, 96
        %s407 = scalar_lea.vmem [#allocation7], %s406
        // Predicated region
        $region37: #{tpu_custom_call.1} parent=27 // pred_check
          %p408 = pneg %p85
        $region38: #{tpu_custom_call.1} parent=27 // pred_check_branch
          %410 = sbr.rel (%p408) target = $region40
        $region39: #{tpu_custom_call.1} parent=27 // pred_region
          %s412 = ssub.s32 1536, 1536
          %413 = vsyncadd %s404, %s412
          %s414 = smul.addr %s20, 12
          %s415 = smul.addr %s414, 128
          %s416 = scalar_lea.hbm %s2, %s415
          %s417 = sshll.u32 %s407, 4
          %s418 = int_to_ptr.vmem [resolvable:$true] %s417
          %423 = dma.vmem_to_hbm [thread:$0]  %s418, 1536, %s416, %s404, 256, 256, 16
        $region40: #{tpu_custom_call.1} parent=27 // pred_fallthru
          _
      $region28: #{tpu_custom_call.1} parent=5 // pred_fallthru
        _
      %p424 = scmp.le.s32.totalorder 2, %s15
      // Predicated region
      $region41: #{tpu_custom_call.1} parent=5 // pred_check
        %p425 = pneg %p424
      $region42: #{tpu_custom_call.1} parent=5 // pred_check_branch
        %427 = sbr.rel (%p425) target = $region44
      $region43: #{tpu_custom_call.1} parent=5 // pred_region
        %s428 = ssub.s32 %s15, 2
        // Predicated region
        $region45: #{tpu_custom_call.1} parent=43 // pred_check
          %p429 = pneg %p91
        $region46: #{tpu_custom_call.1} parent=43 // pred_check_branch
          %431 = sbr.rel (%p429) target = $region48
        $region47: #{tpu_custom_call.1} parent=43 // pred_region
          %s432 = sand.u32 %s76, 1
          %s433 = scalar_lea.sflag [#allocation4], %s432
          %s434 = sand.u32 %s76, 1
          %s435 = smul.addr %s434, 96
          %s436 = scalar_lea.vmem [#allocation7], %s435
          %437 = dma.done %s433, 1536
        $region48: #{tpu_custom_call.1} parent=43 // pred_fallthru
          _
      $region44: #{tpu_custom_call.1} parent=5 // pred_fallthru
        _
    $region6: #{tpu_custom_call.1} parent=1 // loop_footer
      %s19 = sadd.s32 1, %s15
    $region7: #{tpu_custom_call.1} parent=1 // loop_footer_branch
      %14 = sbr.rel target = $region3
    $region8: #{tpu_custom_call.1} parent=1 // loop_exit
      _
    %438 = vsyncpa [#allocation3], 1
    %s439 = scalar_lea.sflag [#allocation3], 1
    %440 = vsyncpa %s439, 1
    %441 = vsyncpa [#allocation6], 1
    %442 = vsyncpa [#allocation4], 1
    %s443 = scalar_lea.sflag [#allocation4], 1
    %444 = vsyncpa %s443, 1

</llo_original>
